<compile_context>
chip_gen: v7x
topology: tpu7x:2x2x1
jax: 0.10.0
libtpu: 0.0.40
codegen_flags: <defaults>
</compile_context>

<pallas_src>
import math
from functools import partial

import numpy as np
import jax
import jax.numpy as jnp
from jax.experimental import pallas as pl
from jax.experimental.pallas import tpu as pltpu

_INV_SQRT2 = 1.0 / math.sqrt(2.0)

# Tiling knobs (see perf review): ~4 MiB of input per grid step, keep the grid
# at >= ~8 steps when possible, cap VMEM explicitly at 32 MiB (above the v5e
# 16 MiB default, at the v6e/v7x default, far below v7x's 64 MiB physical).
_TARGET_IN_BYTES = 4 * 1024 * 1024
_MIN_GRID_STEPS = 8
_VMEM_LIMIT_BYTES = 32 * 1024 * 1024


# ----------------------------------------------------------------------------
# Pallas kernels: Haar butterflies on the VPU over W-lane-dense slabs
# ----------------------------------------------------------------------------
def _dwt2d_kernel(xe_ref, xo_ref, o_ref, *, wo, k):
    # xe_ref / xo_ref: (mb, ht, 2*Wo).  Lane block [:, :, :Wo] holds even-H
    # rows, [:, :, Wo:] holds odd-H rows; xe carries even-W samples, xo odd-W.
    # o_ref: (4, mb, ht, Wo); subband order [ll, lh, hl, hh] (1st letter = W
    # filter, 2nd = H filter), matching torch.cat([xll, xlh, xhl, xhh], dim=1).
    xe = xe_ref[...].astype(jnp.float32)
    xo = xo_ref[...].astype(jnp.float32)
    p00 = xe[..., :wo]   # x[2h  , 2w  ]
    p10 = xe[..., wo:]   # x[2h+1, 2w  ]
    p01 = xo[..., :wo]   # x[2h  , 2w+1]
    p11 = xo[..., wo:]   # x[2h+1, 2w+1]
    sl = p00 + p01       # W-low , even-H row
    su = p10 + p11       # W-low , odd-H row
    dl = p00 - p01       # W-high, even-H row
    du = p10 - p11       # W-high, odd-H row

    def put(i, v):
        if k != 1.0:
            v = v * k
        o_ref[i] = v.astype(o_ref.dtype)

    put(0, sl + su)   # ll
    put(1, sl - su)   # lh (H-high)
    put(2, dl + du)   # hl (W-high)
    put(3, dl - du)   # hh


def _dwt3d_kernel(xe_ref, xo_ref, o_ref, *, wo, k):
    # xe_ref / xo_ref: (mb, 2, ht, 2*Wo) with [m, t-parity, ho, ph*Wo + wo].
    # o_ref: (8, mb, ht, Wo); subband index = sT*4 + sH*2 + sW (torch cat order
    # [lll, llh, lhl, lhh, hll, hlh, hhl, hhh]; letters = T, H, W filters).
    xe = xe_ref[...].astype(jnp.float32)
    xo = xo_ref[...].astype(jnp.float32)
    p000 = xe[:, 0, :, :wo]   # (kt,kh,kw) = (0,0,0)
    p010 = xe[:, 0, :, wo:]   # (0,1,0)
    p100 = xe[:, 1, :, :wo]   # (1,0,0)
    p110 = xe[:, 1, :, wo:]   # (1,1,0)
    p001 = xo[:, 0, :, :wo]   # (0,0,1)
    p011 = xo[:, 0, :, wo:]   # (0,1,1)
    p101 = xo[:, 1, :, :wo]   # (1,0,1)
    p111 = xo[:, 1, :, wo:]   # (1,1,1)
    # W butterfly
    s00 = p000 + p001; d00 = p000 - p001
    s01 = p010 + p011; d01 = p010 - p011
    s10 = p100 + p101; d10 = p100 - p101
    s11 = p110 + p111; d11 = p110 - p111
    # H butterfly (per t-parity): {W-low, W-high} x {H-low, H-high}
    ll0 = s00 + s01; lh0 = s00 - s01
    hl0 = d00 + d01; hh0 = d00 - d01
    ll1 = s10 + s11; lh1 = s10 - s11
    hl1 = d10 + d11; hh1 = d10 - d11

    def put(i, v):
        if k != 1.0:
            v = v * k
        o_ref[i] = v.astype(o_ref.dtype)

    # T butterfly -> subbands
    put(0, ll0 + ll1)   # lll
    put(1, hl0 + hl1)   # llh (W-high)
    put(2, lh0 + lh1)   # lhl (H-high)
    put(3, hh0 + hh1)   # lhh
    put(4, ll0 - ll1)   # hll (T-high)
    put(5, hl0 - hl1)   # hlh
    put(6, lh0 - lh1)   # hhl
    put(7, hh0 - hh1)   # hhh


# ----------------------------------------------------------------------------
# Tile planner: fold planes / tile Ho to hit the per-step byte target
# ----------------------------------------------------------------------------
def _plan_tiles(B, M, Ho, Wo, n_tpar, itemsize):
    """Returns (mb = planes per block, ht = Ho rows per block)."""
    # Input bytes (xe + xo together) per Ho-row of one fused plane.
    row_bytes = 2 * n_tpar * (2 * Wo) * itemsize
    plane_bytes = row_bytes * Ho
    if plane_bytes >= _TARGET_IN_BYTES:
        # Big planes (high resolution): one plane per step, tile Ho so the
        # double-buffered working set stays bounded (v7x: 64 MiB physical).
        mb = 1
        ht = max(8, (_TARGET_IN_BYTES // max(row_bytes, 1)) // 8 * 8)
        ht = min(ht, Ho)             # ht is a multiple of 8 or == Ho (Mosaic rule)
    else:
        # Small planes: fuse several (channel / frame-pair) planes per step,
        # but keep enough grid steps for megacore sharding + pipelining.
        ht = Ho
        mb = int(max(1, min(M, _TARGET_IN_BYTES // max(plane_bytes, 1))))
        while mb > 1 and B * pl.cdiv(M, mb) < _MIN_GRID_STEPS:
            mb = max(1, mb // 2)
    return mb, ht


def _compiler_params():
    return pltpu.CompilerParams(
        dimension_semantics=("parallel", "parallel", "parallel"),
        vmem_limit_bytes=_VMEM_LIMIT_BYTES,
        allow_input_fusion=[True, True],
    )


# ----------------------------------------------------------------------------
# DWT wrappers (glue: reflect pad only when odd + free reshapes only)
# ----------------------------------------------------------------------------
def dwt2d(x, rescale=True):
    """x: (B, C, 1, H, W) -> (B, 4C, 1, Ho, Wo)."""
    B, C, T, H, W = x.shape
    assert T == 1
    Ho, Wo = (H + 1) // 2, (W + 1) // 2
    x2 = x[:, :, 0]
    pad_h, pad_w = 2 * Ho - H, 2 * Wo - W
    if pad_h or pad_w:   # torch F.pad(mode='reflect') == jnp.pad(mode='reflect')
        x2 = jnp.pad(x2, ((0, 0), (0, 0), (0, pad_h), (0, pad_w)), mode="reflect")
    # Even/odd W columns (fused into the kernel input when XLA allows); the
    # H-pair is folded onto the lane axis by a free reshape:
    #   view[b, c, ho, ph*Wo + wo] == x[b, c, 2*ho + ph, 2*wo (+1)]
    xe = x2[..., 0::2].reshape(B, C, Ho, 2 * Wo)
    xo = x2[..., 1::2].reshape(B, C, Ho, 2 * Wo)

    itemsize = jnp.dtype(x.dtype).itemsize
    mb, ht = _plan_tiles(B, C, Ho, Wo, 1, itemsize)
    grid = (B, pl.cdiv(C, mb), pl.cdiv(Ho, ht))
    k = 1.0 if rescale else 0.5

    out = pl.pallas_call(
        partial(_dwt2d_kernel, wo=Wo, k=k),
        out_shape=jax.ShapeDtypeStruct((B, 4, C, Ho, Wo), x.dtype),
        grid=grid,
        in_specs=[
            pl.BlockSpec((None, mb, ht, 2 * Wo), lambda b, m, h: (b, m, h, 0)),
            pl.BlockSpec((None, mb, ht, 2 * Wo), lambda b, m, h: (b, m, h, 0)),
        ],
        out_specs=pl.BlockSpec((None, 4, mb, ht, Wo),
                               lambda b, m, h: (b, 0, m, h, 0)),
        compiler_params=_compiler_params(),
    )(xe, xo)
    # (B, 4, C, Ho, Wo) -> (B, 4C, Ho, Wo): contiguous merge, free.
    return out.reshape(B, 4 * C, Ho, Wo)[:, :, None]


def dwt3d(x, rescale=True):
    """x: (B, C, T, H, W) -> (B, 8C, To, Ho, Wo)."""
    B, C, T, H, W = x.shape
    To, Ho, Wo = (T + 1) // 2, (H + 1) // 2, (W + 1) // 2
    pad_t, pad_h, pad_w = 2 * To - T, 2 * Ho - H, 2 * Wo - W
    xp = x
    if pad_t or pad_h or pad_w:
        xp = jnp.pad(x, ((0, 0), (0, 0), (0, pad_t), (0, pad_h), (0, pad_w)),
                     mode="reflect")
    M = C * To
    # Free reshapes only:
    #   view[b, m, pt, ho, ph*Wo + wo] == x[b, c, 2*to+pt, 2*ho+ph, 2*wo (+1)]
    # with m = c*To + to.
    xe = xp[..., 0::2].reshape(B, M, 2, Ho, 2 * Wo)
    xo = xp[..., 1::2].reshape(B, M, 2, Ho, 2 * Wo)

    itemsize = jnp.dtype(x.dtype).itemsize
    mb, ht = _plan_tiles(B, M, Ho, Wo, 2, itemsize)
    grid = (B, pl.cdiv(M, mb), pl.cdiv(Ho, ht))
    k = 1.0 if rescale else float(_INV_SQRT2 ** 3)

    out = pl.pallas_call(
        partial(_dwt3d_kernel, wo=Wo, k=k),
        out_shape=jax.ShapeDtypeStruct((B, 8, M, Ho, Wo), x.dtype),
        grid=grid,
        in_specs=[
            pl.BlockSpec((None, mb, 2, ht, 2 * Wo),
                         lambda b, m, h: (b, m, 0, h, 0)),
            pl.BlockSpec((None, mb, 2, ht, 2 * Wo),
                         lambda b, m, h: (b, m, 0, h, 0)),
        ],
        out_specs=pl.BlockSpec((None, 8, mb, ht, Wo),
                               lambda b, m, h: (b, 0, m, h, 0)),
        compiler_params=_compiler_params(),
    )(xe, xo)
    # (B, 8, C*To, Ho, Wo) -> (B, 8C, To, Ho, Wo): contiguous split+merge, free.
    return out.reshape(B, 8 * C, To, Ho, Wo)


def patcher_forward(x, rescale=True):
    """Mirrors Patcher.forward.  x: (B, C, T, H, W)."""
    T = x.shape[2]
    if T > 1:
        if T % 2 == 1:
            xi, xv = x[:, :, :1], x[:, :, 1:]
            return dwt2d(xi, rescale), dwt3d(xv, rescale)
        return None, dwt3d(x, rescale)
    return dwt2d(x, rescale), None


# ----------------------------------------------------------------------------
# Pure-JAX reference (mirrors the torch conv sequence) for verification
# ----------------------------------------------------------------------------
def _conv_pair(t, axis, out_len):
    c = _INV_SQRT2
    se = [slice(None)] * t.ndim
    so = [slice(None)] * t.ndim
    se[axis] = slice(0, 2 * out_len, 2)
    so[axis] = slice(1, 2 * out_len, 2)
    te, to = t[tuple(se)], t[tuple(so)]
    return (te + to) * c, (te - to) * c


def ref_dwt2d(x, rescale=True):
    B, C, T, H, W = x.shape
    Ho, Wo = (H + 1) // 2, (W + 1) // 2
    xp = jnp.pad(x[:, :, 0], ((0, 0), (0, 0), (0, 1), (0, 1)), mode="reflect")
    xl, xh = _conv_pair(xp, 3, Wo)
    xll, xlh = _conv_pair(xl, 2, Ho)
    xhl, xhh = _conv_pair(xh, 2, Ho)
    out = jnp.concatenate([xll, xlh, xhl, xhh], axis=1)
    if rescale:
        out = out * 2.0
    return out[:, :, None]


def ref_dwt3d(x, rescale=True):
    B, C, T, H, W = x.shape
    To, Ho, Wo = (T + 1) // 2, (H + 1) // 2, (W + 1) // 2
    xp = jnp.pad(x, ((0, 0), (0, 0), (0, 1), (0, 1), (0, 1)), mode="reflect")
    xl, xh = _conv_pair(xp, 2, To)
    xll, xlh = _conv_pair(xl, 3, Ho)
    xhl, xhh = _conv_pair(xh, 3, Ho)
    subs = []
    for t in (xll, xlh, xhl, xhh):
        a, b = _conv_pair(t, 4, Wo)
        subs += [a, b]
    out = jnp.concatenate(subs, axis=1)
    if rescale:
        out = out * (2.0 * math.sqrt(2.0))
    return out


def ref_forward(x, rescale=True):
    T = x.shape[2]
    if T > 1:
        if T % 2 == 1:
            return ref_dwt2d(x[:, :, :1], rescale), ref_dwt3d(x[:, :, 1:], rescale)
        return None, ref_dwt3d(x, rescale)
    return ref_dwt2d(x, rescale), None


if __name__ == "__main__":
    fwd = jax.jit(patcher_forward, static_argnames="rescale")

    # Odd temporal length exercises both the 2D (first frame) and 3D (rest) paths.
    x = jax.random.normal(jax.random.PRNGKey(0), (2, 3, 5, 16, 16), dtype=jnp.float32)
    xi, xv = fwd(x, rescale=True)
    xi = jax.block_until_ready(xi)
    xv = jax.block_until_ready(xv)
    ri, rv = ref_forward(x, rescale=True)
    assert xi.shape == (2, 12, 1, 8, 8), xi.shape
    assert xv.shape == (2, 24, 2, 8, 8), xv.shape
    np.testing.assert_allclose(np.asarray(xi), np.asarray(ri), rtol=1e-5, atol=1e-5)
    np.testing.assert_allclose(np.asarray(xv), np.asarray(rv), rtol=1e-5, atol=1e-5)

    # Odd spatial dims exercise the reflect-pad path (and rescale=False scaling).
    xod = jax.random.normal(jax.random.PRNGKey(1), (1, 2, 3, 9, 11), dtype=jnp.float32)
    xi_o, xv_o = fwd(xod, rescale=False)
    xi_o = jax.block_until_ready(xi_o)
    xv_o = jax.block_until_ready(xv_o)
    ri_o, rv_o = ref_forward(xod, rescale=False)
    assert xi_o.shape == (1, 8, 1, 5, 6), xi_o.shape
    assert xv_o.shape == (1, 16, 1, 5, 6), xv_o.shape
    np.testing.assert_allclose(np.asarray(xi_o), np.asarray(ri_o), rtol=1e-5, atol=1e-5)
    np.testing.assert_allclose(np.asarray(xv_o), np.asarray(rv_o), rtol=1e-5, atol=1e-5)

    # bf16 I/O (memory-bound kernel: halves HBM bytes); butterfly stays in f32.
    xb = jax.random.normal(jax.random.PRNGKey(2), (2, 3, 4, 16, 16), dtype=jnp.bfloat16)
    none_i, xvb = fwd(xb, rescale=True)
    assert none_i is None
    xvb = jax.block_until_ready(xvb)
    assert xvb.shape == (2, 24, 2, 8, 8) and xvb.dtype == jnp.bfloat16
    rvb = ref_dwt3d(xb.astype(jnp.float32), rescale=True)
    np.testing.assert_allclose(np.asarray(xvb, dtype=np.float32), np.asarray(rvb),
                               rtol=2e-2, atol=2e-2)

    print("KERNEL_OK")
</pallas_src>

<mosaic_0001>
module attributes {stable_mosaic.version = 11 : i64} {
  func.func @_dwt3d_kernel(%arg0: i32, %arg1: i32, %arg2: i32, %arg3: memref<1x1x2x8x16xf32, #tpu.memory_space<vmem>>, %arg4: memref<1x1x2x8x16xf32, #tpu.memory_space<vmem>>, %arg5: memref<1x8x1x8x8xf32, #tpu.memory_space<vmem>>) attributes {dimension_semantics = [#tpu.dimension_semantics<parallel>, #tpu.dimension_semantics<parallel>, #tpu.dimension_semantics<parallel>], iteration_bounds = array<i64: 2, 6, 1>, scalar_prefetch = 0 : i64, scratch_operands = 0 : i64, tpu.core_type = #tpu.core_type<tc>, window_params = [{transform_indices = @transform_0, window_bounds = array<i64: 1, 1, 2, 8, 16>}, {transform_indices = @transform_1, window_bounds = array<i64: 1, 1, 2, 8, 16>}, {transform_indices = @transform_2, window_bounds = array<i64: 1, 8, 1, 8, 8>}]} {
    %c0 = arith.constant 0 : index
    %c0_0 = arith.constant 0 : index
    %c0_1 = arith.constant 0 : index
    %c0_2 = arith.constant 0 : index
    %c0_3 = arith.constant 0 : index
    %0 = vector.load %arg3[%c0, %c0_0, %c0_1, %c0_2, %c0_3] : memref<1x1x2x8x16xf32, #tpu.memory_space<vmem>>, vector<1x1x2x8x16xf32>
    %1 = vector.shape_cast %0 : vector<1x1x2x8x16xf32> to vector<1x2x8x16xf32>
    %c0_4 = arith.constant 0 : index
    %c0_5 = arith.constant 0 : index
    %c0_6 = arith.constant 0 : index
    %c0_7 = arith.constant 0 : index
    %c0_8 = arith.constant 0 : index
    %2 = vector.load %arg4[%c0_4, %c0_5, %c0_6, %c0_7, %c0_8] : memref<1x1x2x8x16xf32, #tpu.memory_space<vmem>>, vector<1x1x2x8x16xf32>
    %3 = vector.shape_cast %2 : vector<1x1x2x8x16xf32> to vector<1x2x8x16xf32>
    %4 = vector.extract_strided_slice %1 {offsets = [0, 0, 0, 0], sizes = [1, 1, 8, 8], strides = [1, 1, 1, 1]} : vector<1x2x8x16xf32> to vector<1x1x8x8xf32>
    %5 = vector.shape_cast %4 : vector<1x1x8x8xf32> to vector<1x8x8xf32>
    %6 = vector.extract_strided_slice %1 {offsets = [0, 0, 0, 8], sizes = [1, 1, 8, 8], strides = [1, 1, 1, 1]} : vector<1x2x8x16xf32> to vector<1x1x8x8xf32>
    %7 = vector.shape_cast %6 : vector<1x1x8x8xf32> to vector<1x8x8xf32>
    %8 = vector.extract_strided_slice %1 {offsets = [0, 1, 0, 0], sizes = [1, 1, 8, 8], strides = [1, 1, 1, 1]} : vector<1x2x8x16xf32> to vector<1x1x8x8xf32>
    %9 = vector.shape_cast %8 : vector<1x1x8x8xf32> to vector<1x8x8xf32>
    %10 = vector.extract_strided_slice %1 {offsets = [0, 1, 0, 8], sizes = [1, 1, 8, 8], strides = [1, 1, 1, 1]} : vector<1x2x8x16xf32> to vector<1x1x8x8xf32>
    %11 = vector.shape_cast %10 : vector<1x1x8x8xf32> to vector<1x8x8xf32>
    %12 = vector.extract_strided_slice %3 {offsets = [0, 0, 0, 0], sizes = [1, 1, 8, 8], strides = [1, 1, 1, 1]} : vector<1x2x8x16xf32> to vector<1x1x8x8xf32>
    %13 = vector.shape_cast %12 : vector<1x1x8x8xf32> to vector<1x8x8xf32>
    %14 = vector.extract_strided_slice %3 {offsets = [0, 0, 0, 8], sizes = [1, 1, 8, 8], strides = [1, 1, 1, 1]} : vector<1x2x8x16xf32> to vector<1x1x8x8xf32>
    %15 = vector.shape_cast %14 : vector<1x1x8x8xf32> to vector<1x8x8xf32>
    %16 = vector.extract_strided_slice %3 {offsets = [0, 1, 0, 0], sizes = [1, 1, 8, 8], strides = [1, 1, 1, 1]} : vector<1x2x8x16xf32> to vector<1x1x8x8xf32>
    %17 = vector.shape_cast %16 : vector<1x1x8x8xf32> to vector<1x8x8xf32>
    %18 = vector.extract_strided_slice %3 {offsets = [0, 1, 0, 8], sizes = [1, 1, 8, 8], strides = [1, 1, 1, 1]} : vector<1x2x8x16xf32> to vector<1x1x8x8xf32>
    %19 = vector.shape_cast %18 : vector<1x1x8x8xf32> to vector<1x8x8xf32>
    %20 = arith.addf %5, %13 : vector<1x8x8xf32>
    %21 = arith.subf %5, %13 : vector<1x8x8xf32>
    %22 = arith.addf %7, %15 : vector<1x8x8xf32>
    %23 = arith.subf %7, %15 : vector<1x8x8xf32>
    %24 = arith.addf %9, %17 : vector<1x8x8xf32>
    %25 = arith.subf %9, %17 : vector<1x8x8xf32>
    %26 = arith.addf %11, %19 : vector<1x8x8xf32>
    %27 = arith.subf %11, %19 : vector<1x8x8xf32>
    %28 = arith.addf %20, %22 : vector<1x8x8xf32>
    %29 = arith.subf %20, %22 : vector<1x8x8xf32>
    %30 = arith.addf %21, %23 : vector<1x8x8xf32>
    %31 = arith.subf %21, %23 : vector<1x8x8xf32>
    %32 = arith.addf %24, %26 : vector<1x8x8xf32>
    %33 = arith.subf %24, %26 : vector<1x8x8xf32>
    %34 = arith.addf %25, %27 : vector<1x8x8xf32>
    %35 = arith.subf %25, %27 : vector<1x8x8xf32>
    %36 = arith.addf %28, %32 : vector<1x8x8xf32>
    %c0_9 = arith.constant 0 : index
    %c0_10 = arith.constant 0 : index
    %c0_11 = arith.constant 0 : index
    %c0_12 = arith.constant 0 : index
    %c0_13 = arith.constant 0 : index
    %37 = vector.load %arg5[%c0_9, %c0_10, %c0_11, %c0_12, %c0_13] : memref<1x8x1x8x8xf32, #tpu.memory_space<vmem>>, vector<1x1x1x8x8xf32>
    %38 = vector.shape_cast %37 : vector<1x1x1x8x8xf32> to vector<1x8x8xf32>
    %39 = vector.shape_cast %36 : vector<1x8x8xf32> to vector<1x1x1x8x8xf32>
    tpu.vector_store %arg5[%c0_9, %c0_10, %c0_11, %c0_12, %c0_13], %39 {strides = array<i32>} : memref<1x8x1x8x8xf32, #tpu.memory_space<vmem>>, vector<1x1x1x8x8xf32>,
    %40 = arith.addf %30, %34 : vector<1x8x8xf32>
    %c0_14 = arith.constant 0 : index
    %c1 = arith.constant 1 : index
    %c0_15 = arith.constant 0 : index
    %c0_16 = arith.constant 0 : index
    %c0_17 = arith.constant 0 : index
    %41 = vector.load %arg5[%c0_14, %c1, %c0_15, %c0_16, %c0_17] : memref<1x8x1x8x8xf32, #tpu.memory_space<vmem>>, vector<1x1x1x8x8xf32>
    %42 = vector.shape_cast %41 : vector<1x1x1x8x8xf32> to vector<1x8x8xf32>
    %43 = vector.shape_cast %40 : vector<1x8x8xf32> to vector<1x1x1x8x8xf32>
    tpu.vector_store %arg5[%c0_14, %c1, %c0_15, %c0_16, %c0_17], %43 {strides = array<i32>} : memref<1x8x1x8x8xf32, #tpu.memory_space<vmem>>, vector<1x1x1x8x8xf32>,
    %44 = arith.addf %29, %33 : vector<1x8x8xf32>
    %c0_18 = arith.constant 0 : index
    %c2 = arith.constant 2 : index
    %c0_19 = arith.constant 0 : index
    %c0_20 = arith.constant 0 : index
    %c0_21 = arith.constant 0 : index
    %45 = vector.load %arg5[%c0_18, %c2, %c0_19, %c0_20, %c0_21] : memref<1x8x1x8x8xf32, #tpu.memory_space<vmem>>, vector<1x1x1x8x8xf32>
    %46 = vector.shape_cast %45 : vector<1x1x1x8x8xf32> to vector<1x8x8xf32>
    %47 = vector.shape_cast %44 : vector<1x8x8xf32> to vector<1x1x1x8x8xf32>
    tpu.vector_store %arg5[%c0_18, %c2, %c0_19, %c0_20, %c0_21], %47 {strides = array<i32>} : memref<1x8x1x8x8xf32, #tpu.memory_space<vmem>>, vector<1x1x1x8x8xf32>,
    %48 = arith.addf %31, %35 : vector<1x8x8xf32>
    %c0_22 = arith.constant 0 : index
    %c3 = arith.constant 3 : index
    %c0_23 = arith.constant 0 : index
    %c0_24 = arith.constant 0 : index
    %c0_25 = arith.constant 0 : index
    %49 = vector.load %arg5[%c0_22, %c3, %c0_23, %c0_24, %c0_25] : memref<1x8x1x8x8xf32, #tpu.memory_space<vmem>>, vector<1x1x1x8x8xf32>
    %50 = vector.shape_cast %49 : vector<1x1x1x8x8xf32> to vector<1x8x8xf32>
    %51 = vector.shape_cast %48 : vector<1x8x8xf32> to vector<1x1x1x8x8xf32>
    tpu.vector_store %arg5[%c0_22, %c3, %c0_23, %c0_24, %c0_25], %51 {strides = array<i32>} : memref<1x8x1x8x8xf32, #tpu.memory_space<vmem>>, vector<1x1x1x8x8xf32>,
    %52 = arith.subf %28, %32 : vector<1x8x8xf32>
    %c0_26 = arith.constant 0 : index
    %c4 = arith.constant 4 : index
    %c0_27 = arith.constant 0 : index
    %c0_28 = arith.constant 0 : index
    %c0_29 = arith.constant 0 : index
    %53 = vector.load %arg5[%c0_26, %c4, %c0_27, %c0_28, %c0_29] : memref<1x8x1x8x8xf32, #tpu.memory_space<vmem>>, vector<1x1x1x8x8xf32>
    %54 = vector.shape_cast %53 : vector<1x1x1x8x8xf32> to vector<1x8x8xf32>
    %55 = vector.shape_cast %52 : vector<1x8x8xf32> to vector<1x1x1x8x8xf32>
    tpu.vector_store %arg5[%c0_26, %c4, %c0_27, %c0_28, %c0_29], %55 {strides = array<i32>} : memref<1x8x1x8x8xf32, #tpu.memory_space<vmem>>, vector<1x1x1x8x8xf32>,
    %56 = arith.subf %30, %34 : vector<1x8x8xf32>
    %c0_30 = arith.constant 0 : index
    %c5 = arith.constant 5 : index
    %c0_31 = arith.constant 0 : index
    %c0_32 = arith.constant 0 : index
    %c0_33 = arith.constant 0 : index
    %57 = vector.load %arg5[%c0_30, %c5, %c0_31, %c0_32, %c0_33] : memref<1x8x1x8x8xf32, #tpu.memory_space<vmem>>, vector<1x1x1x8x8xf32>
    %58 = vector.shape_cast %57 : vector<1x1x1x8x8xf32> to vector<1x8x8xf32>
    %59 = vector.shape_cast %56 : vector<1x8x8xf32> to vector<1x1x1x8x8xf32>
    tpu.vector_store %arg5[%c0_30, %c5, %c0_31, %c0_32, %c0_33], %59 {strides = array<i32>} : memref<1x8x1x8x8xf32, #tpu.memory_space<vmem>>, vector<1x1x1x8x8xf32>,
    %60 = arith.subf %29, %33 : vector<1x8x8xf32>
    %c0_34 = arith.constant 0 : index
    %c6 = arith.constant 6 : index
    %c0_35 = arith.constant 0 : index
    %c0_36 = arith.constant 0 : index
    %c0_37 = arith.constant 0 : index
    %61 = vector.load %arg5[%c0_34, %c6, %c0_35, %c0_36, %c0_37] : memref<1x8x1x8x8xf32, #tpu.memory_space<vmem>>, vector<1x1x1x8x8xf32>
    %62 = vector.shape_cast %61 : vector<1x1x1x8x8xf32> to vector<1x8x8xf32>
    %63 = vector.shape_cast %60 : vector<1x8x8xf32> to vector<1x1x1x8x8xf32>
    tpu.vector_store %arg5[%c0_34, %c6, %c0_35, %c0_36, %c0_37], %63 {strides = array<i32>} : memref<1x8x1x8x8xf32, #tpu.memory_space<vmem>>, vector<1x1x1x8x8xf32>,
    %64 = arith.subf %31, %35 : vector<1x8x8xf32>
    %c0_38 = arith.constant 0 : index
    %c7 = arith.constant 7 : index
    %c0_39 = arith.constant 0 : index
    %c0_40 = arith.constant 0 : index
    %c0_41 = arith.constant 0 : index
    %65 = vector.load %arg5[%c0_38, %c7, %c0_39, %c0_40, %c0_41] : memref<1x8x1x8x8xf32, #tpu.memory_space<vmem>>, vector<1x1x1x8x8xf32>
    %66 = vector.shape_cast %65 : vector<1x1x1x8x8xf32> to vector<1x8x8xf32>
    %67 = vector.shape_cast %64 : vector<1x8x8xf32> to vector<1x1x1x8x8xf32>
    tpu.vector_store %arg5[%c0_38, %c7, %c0_39, %c0_40, %c0_41], %67 {strides = array<i32>} : memref<1x8x1x8x8xf32, #tpu.memory_space<vmem>>, vector<1x1x1x8x8xf32>,
    return
  }
  func.func @transform_0(%arg0: i32, %arg1: i32, %arg2: i32) -> (i32, i32, i32, i32, i32) {
    %c0_i32 = arith.constant 0 : i32
    %c0_i32_0 = arith.constant 0 : i32
    %c0_i32_1 = arith.constant 0 : i32
    return %arg0, %arg1, %c0_i32, %arg2, %c0_i32_0 : i32, i32, i32, i32, i32
  }
  func.func @transform_1(%arg0: i32, %arg1: i32, %arg2: i32) -> (i32, i32, i32, i32, i32) {
    %c0_i32 = arith.constant 0 : i32
    %c0_i32_0 = arith.constant 0 : i32
    %c0_i32_1 = arith.constant 0 : i32
    return %arg0, %arg1, %c0_i32, %arg2, %c0_i32_0 : i32, i32, i32, i32, i32
  }
  func.func @transform_2(%arg0: i32, %arg1: i32, %arg2: i32) -> (i32, i32, i32, i32, i32) {
    %c0_i32 = arith.constant 0 : i32
    %c0_i32_0 = arith.constant 0 : i32
    %c0_i32_1 = arith.constant 0 : i32
    return %arg0, %c0_i32, %arg1, %arg2, %c0_i32_0 : i32, i32, i32, i32, i32
  }
}

module attributes {stable_mosaic.version = 11 : i64} {
  func.func @_dwt2d_kernel(%arg0: i32, %arg1: i32, %arg2: i32, %arg3: memref<1x1x8x16xf32, #tpu.memory_space<vmem>>, %arg4: memref<1x1x8x16xf32, #tpu.memory_space<vmem>>, %arg5: memref<1x4x1x8x8xf32, #tpu.memory_space<vmem>>) attributes {dimension_semantics = [#tpu.dimension_semantics<parallel>, #tpu.dimension_semantics<parallel>, #tpu.dimension_semantics<parallel>], iteration_bounds = array<i64: 2, 3, 1>, scalar_prefetch = 0 : i64, scratch_operands = 0 : i64, tpu.core_type = #tpu.core_type<tc>, window_params = [{transform_indices = @transform_0, window_bounds = array<i64: 1, 1, 8, 16>}, {transform_indices = @transform_1, window_bounds = array<i64: 1, 1, 8, 16>}, {transform_indices = @transform_2, window_bounds = array<i64: 1, 4, 1, 8, 8>}]} {
    %c0 = arith.constant 0 : index
    %c0_0 = arith.constant 0 : index
    %c0_1 = arith.constant 0 : index
    %c0_2 = arith.constant 0 : index
    %0 = vector.load %arg3[%c0, %c0_0, %c0_1, %c0_2] : memref<1x1x8x16xf32, #tpu.memory_space<vmem>>, vector<1x1x8x16xf32>
    %1 = vector.shape_cast %0 : vector<1x1x8x16xf32> to vector<1x8x16xf32>
    %c0_3 = arith.constant 0 : index
    %c0_4 = arith.constant 0 : index
    %c0_5 = arith.constant 0 : index
    %c0_6 = arith.constant 0 : index
    %2 = vector.load %arg4[%c0_3, %c0_4, %c0_5, %c0_6] : memref<1x1x8x16xf32, #tpu.memory_space<vmem>>, vector<1x1x8x16xf32>
    %3 = vector.shape_cast %2 : vector<1x1x8x16xf32> to vector<1x8x16xf32>
    %4 = vector.extract_strided_slice %1 {offsets = [0, 0, 0], sizes = [1, 8, 8], strides = [1, 1, 1]} : vector<1x8x16xf32> to vector<1x8x8xf32>
    %5 = vector.extract_strided_slice %1 {offsets = [0, 0, 8], sizes = [1, 8, 8], strides = [1, 1, 1]} : vector<1x8x16xf32> to vector<1x8x8xf32>
    %6 = vector.extract_strided_slice %3 {offsets = [0, 0, 0], sizes = [1, 8, 8], strides = [1, 1, 1]} : vector<1x8x16xf32> to vector<1x8x8xf32>
    %7 = vector.extract_strided_slice %3 {offsets = [0, 0, 8], sizes = [1, 8, 8], strides = [1, 1, 1]} : vector<1x8x16xf32> to vector<1x8x8xf32>
    %8 = arith.addf %4, %6 : vector<1x8x8xf32>
    %9 = arith.addf %5, %7 : vector<1x8x8xf32>
    %10 = arith.subf %4, %6 : vector<1x8x8xf32>
    %11 = arith.subf %5, %7 : vector<1x8x8xf32>
    %12 = arith.addf %8, %9 : vector<1x8x8xf32>
    %c0_7 = arith.constant 0 : index
    %c0_8 = arith.constant 0 : index
    %c0_9 = arith.constant 0 : index
    %c0_10 = arith.constant 0 : index
    %c0_11 = arith.constant 0 : index
    %13 = vector.load %arg5[%c0_7, %c0_8, %c0_9, %c0_10, %c0_11] : memref<1x4x1x8x8xf32, #tpu.memory_space<vmem>>, vector<1x1x1x8x8xf32>
    %14 = vector.shape_cast %13 : vector<1x1x1x8x8xf32> to vector<1x8x8xf32>
    %15 = vector.shape_cast %12 : vector<1x8x8xf32> to vector<1x1x1x8x8xf32>
    tpu.vector_store %arg5[%c0_7, %c0_8, %c0_9, %c0_10, %c0_11], %15 {strides = array<i32>} : memref<1x4x1x8x8xf32, #tpu.memory_space<vmem>>, vector<1x1x1x8x8xf32>,
    %16 = arith.subf %8, %9 : vector<1x8x8xf32>
    %c0_12 = arith.constant 0 : index
    %c1 = arith.constant 1 : index
    %c0_13 = arith.constant 0 : index
    %c0_14 = arith.constant 0 : index
    %c0_15 = arith.constant 0 : index
    %17 = vector.load %arg5[%c0_12, %c1, %c0_13, %c0_14, %c0_15] : memref<1x4x1x8x8xf32, #tpu.memory_space<vmem>>, vector<1x1x1x8x8xf32>
    %18 = vector.shape_cast %17 : vector<1x1x1x8x8xf32> to vector<1x8x8xf32>
    %19 = vector.shape_cast %16 : vector<1x8x8xf32> to vector<1x1x1x8x8xf32>
    tpu.vector_store %arg5[%c0_12, %c1, %c0_13, %c0_14, %c0_15], %19 {strides = array<i32>} : memref<1x4x1x8x8xf32, #tpu.memory_space<vmem>>, vector<1x1x1x8x8xf32>,
    %20 = arith.addf %10, %11 : vector<1x8x8xf32>
    %c0_16 = arith.constant 0 : index
    %c2 = arith.constant 2 : index
    %c0_17 = arith.constant 0 : index
    %c0_18 = arith.constant 0 : index
    %c0_19 = arith.constant 0 : index
    %21 = vector.load %arg5[%c0_16, %c2, %c0_17, %c0_18, %c0_19] : memref<1x4x1x8x8xf32, #tpu.memory_space<vmem>>, vector<1x1x1x8x8xf32>
    %22 = vector.shape_cast %21 : vector<1x1x1x8x8xf32> to vector<1x8x8xf32>
    %23 = vector.shape_cast %20 : vector<1x8x8xf32> to vector<1x1x1x8x8xf32>
    tpu.vector_store %arg5[%c0_16, %c2, %c0_17, %c0_18, %c0_19], %23 {strides = array<i32>} : memref<1x4x1x8x8xf32, #tpu.memory_space<vmem>>, vector<1x1x1x8x8xf32>,
    %24 = arith.subf %10, %11 : vector<1x8x8xf32>
    %c0_20 = arith.constant 0 : index
    %c3 = arith.constant 3 : index
    %c0_21 = arith.constant 0 : index
    %c0_22 = arith.constant 0 : index
    %c0_23 = arith.constant 0 : index
    %25 = vector.load %arg5[%c0_20, %c3, %c0_21, %c0_22, %c0_23] : memref<1x4x1x8x8xf32, #tpu.memory_space<vmem>>, vector<1x1x1x8x8xf32>
    %26 = vector.shape_cast %25 : vector<1x1x1x8x8xf32> to vector<1x8x8xf32>
    %27 = vector.shape_cast %24 : vector<1x8x8xf32> to vector<1x1x1x8x8xf32>
    tpu.vector_store %arg5[%c0_20, %c3, %c0_21, %c0_22, %c0_23], %27 {strides = array<i32>} : memref<1x4x1x8x8xf32, #tpu.memory_space<vmem>>, vector<1x1x1x8x8xf32>,
    return
  }
  func.func @transform_0(%arg0: i32, %arg1: i32, %arg2: i32) -> (i32, i32, i32, i32) {
    %c0_i32 = arith.constant 0 : i32
    %c0_i32_0 = arith.constant 0 : i32
    return %arg0, %arg1, %arg2, %c0_i32 : i32, i32, i32, i32
  }
  func.func @transform_1(%arg0: i32, %arg1: i32, %arg2: i32) -> (i32, i32, i32, i32) {
    %c0_i32 = arith.constant 0 : i32
    %c0_i32_0 = arith.constant 0 : i32
    return %arg0, %arg1, %arg2, %c0_i32 : i32, i32, i32, i32
  }
  func.func @transform_2(%arg0: i32, %arg1: i32, %arg2: i32) -> (i32, i32, i32, i32, i32) {
    %c0_i32 = arith.constant 0 : i32
    %c0_i32_0 = arith.constant 0 : i32
    %c0_i32_1 = arith.constant 0 : i32
    return %arg0, %c0_i32, %arg1, %arg2, %c0_i32_0 : i32, i32, i32, i32, i32
  }
}

</mosaic_0001>

<llo_original>
// kernel: patcher_forward.3
$region0: #{patcher_forward.3}
  #allocation0 [shape = 'u32[]', space=smem, size = 0x4, offset = 0x4, fixed_abs, tag = 'smem constant byte address 0x4 - core index']
  #allocation1 [shape = 'u32[144,128]{1,0:T(1,128)}', space=vmem, size = 0x12000, scoped, tag = 'internal scratch']
  %s0 = inlined_call_operand.vmem [shape: f32[2,6,2,8,16], index: 0, kind: input, shape index: {}]
  %s1 = inlined_call_operand.vmem [shape: f32[2,6,2,8,16], index: 1, kind: input, shape index: {}]
  %s2 = inlined_call_operand.vmem [shape: f32[2,8,6,8,8], index: 2, kind: output, shape index: {}]
  %s3 = sld [smem:[#allocation0]]
  $region75: #{patcher_forward.3} parent=0
    _
  %s5 = ssub.s32 1, %s3
  %s6 = scalar_select 0, %s5, %s3
  $region1: #{patcher_forward.3} parent=0
    #allocation2 [shape = 'u8[65536]{0}', space=vmem, size = 0x10000, scoped, tag = 'output window, operand 0']
    loop: start=0, step=1, limit=14
    $region2: #{patcher_forward.3} parent=1 // loop_pre_header
      _
    $region3: #{patcher_forward.3} parent=1 // loop_header
      %s8 = sphi 0, %s12
      %p9 = scmp.ge.s32.totalorder %s8, 14
      %s15 = sphi 0, %s34
      %s16 = sphi 0, %s30
      %s17 = sphi 0, %s26
      %s18 = sphi 0, %s15
      %s19 = sphi 0, %s16
      %s20 = sphi 0, %s17
      %s21 = sphi 0, %s18
      %s22 = sphi 0, %s19
      %s23 = sphi 0, %s20
      %s41 = sphi 0, %s43
      %s44 = sphi 0, %s41
      %s45 = sphi 0, %s44
      %s61 = sphi 0, %s45
      %s71 = sphi 0, %s73
      %s74 = sphi 0, %s71
      %s75 = sphi 0, %s74
      %s91 = sphi 0, %s75
      %s101 = sphi 0, %s103
      %s104 = sphi 0, %s101
      %s105 = sphi 0, %s104
      %s121 = sphi 0, %s105
    $region4: #{patcher_forward.3} parent=1 // loop_header_branch
      %11 = sbr.rel (%p9) target = $region8
    $region5: #{patcher_forward.3} parent=1 // loop_body
      %s13 = ssub.s32 %s8, 1
      %s14 = ssub.s32 %s8, 2
      %s24 = sadd.s32 1, %s17
      %p25 = scmp.ge.s32.totalorder %s24, 1
      %s26 = scalar_select %p25, 0, %s24
      %s27 = sadd.s32 1, %s16
      %s28 = scalar_select %p25, %s27, %s16
      %p29 = scmp.ge.s32.totalorder %s28, 6
      %s30 = scalar_select %p29, 0, %s28
      %s31 = sadd.s32 1, %s15
      %s32 = scalar_select %p29, %s31, %s15
      %p33 = scmp.ge.s32.totalorder %s32, 2
      %s34 = scalar_select %p33, 0, %s32
      %s35 = ssub.s32 %s15, %s34
      %s36 = ssub.s32 %s16, %s30
      %s37 = sor.u32 %s35, %s36
      %s38 = ssub.s32 %s17, %s26
      %s39 = sor.u32 %s37, %s38
      %p40 = scmp.eq.s32.totalorder %s39, 0
      %s42 = sadd.s32 %s41, 1
      %s43 = scalar_select %p40, %s41, %s42
      %p46 = pneg %p40
      %p47 = scmp.eq.s32.totalorder %s8, 11
      %p48 = por %p46, %p47
      %p49 = scmp.ne.s32.totalorder %s41, %s44
      %p50 = scmp.eq.s32.totalorder %s8, 0
      %p51 = por %p49, %p50
      %p52 = scmp.ne.s32.totalorder %s41, %s44
      %p53 = scmp.eq.s32.totalorder %s13, 11
      %p54 = por %p52, %p53
      %p55 = scmp.ne.s32.totalorder %s44, %s45
      %p56 = scmp.eq.s32.totalorder %s13, 0
      %p57 = por %p55, %p56
      %p58 = scmp.ne.s32.totalorder %s44, %s45
      %p59 = scmp.eq.s32.totalorder %s14, 11
      %p60 = por %p58, %p59
      %p62 = scmp.ne.s32.totalorder %s45, %s61
      %p63 = scmp.eq.s32.totalorder %s14, 0
      %p64 = por %p62, %p63
      %s65 = ssub.s32 %s15, %s34
      %s66 = ssub.s32 %s16, %s30
      %s67 = sor.u32 %s65, %s66
      %s68 = ssub.s32 %s17, %s26
      %s69 = sor.u32 %s67, %s68
      %p70 = scmp.eq.s32.totalorder %s69, 0
      %s72 = sadd.s32 %s71, 1
      %s73 = scalar_select %p70, %s71, %s72
      %p76 = pneg %p70
      %p77 = scmp.eq.s32.totalorder %s8, 11
      %p78 = por %p76, %p77
      %p79 = scmp.ne.s32.totalorder %s71, %s74
      %p80 = scmp.eq.s32.totalorder %s8, 0
      %p81 = por %p79, %p80
      %p82 = scmp.ne.s32.totalorder %s71, %s74
      %p83 = scmp.eq.s32.totalorder %s13, 11
      %p84 = por %p82, %p83
      %p85 = scmp.ne.s32.totalorder %s74, %s75
      %p86 = scmp.eq.s32.totalorder %s13, 0
      %p87 = por %p85, %p86
      %p88 = scmp.ne.s32.totalorder %s74, %s75
      %p89 = scmp.eq.s32.totalorder %s14, 11
      %p90 = por %p88, %p89
      %p92 = scmp.ne.s32.totalorder %s75, %s91
      %p93 = scmp.eq.s32.totalorder %s14, 0
      %p94 = por %p92, %p93
      %s95 = ssub.s32 %s15, %s34
      %s96 = ssub.s32 %s16, %s30
      %s97 = sor.u32 %s95, %s96
      %s98 = ssub.s32 %s17, %s26
      %s99 = sor.u32 %s97, %s98
      %p100 = scmp.eq.s32.totalorder %s99, 0
      %s102 = sadd.s32 %s101, 1
      %s103 = scalar_select %p100, %s101, %s102
      %p106 = pneg %p100
      %p107 = scmp.eq.s32.totalorder %s8, 11
      %p108 = por %p106, %p107
      %p109 = scmp.ne.s32.totalorder %s101, %s104
      %p110 = scmp.eq.s32.totalorder %s8, 0
      %p111 = por %p109, %p110
      %p112 = scmp.ne.s32.totalorder %s101, %s104
      %p113 = scmp.eq.s32.totalorder %s13, 11
      %p114 = por %p112, %p113
      %p115 = scmp.ne.s32.totalorder %s104, %s105
      %p116 = scmp.eq.s32.totalorder %s13, 0
      %p117 = por %p115, %p116
      %p118 = scmp.ne.s32.totalorder %s104, %s105
      %p119 = scmp.eq.s32.totalorder %s14, 11
      %p120 = por %p118, %p119
      %p122 = scmp.ne.s32.totalorder %s105, %s121
      %p123 = scmp.eq.s32.totalorder %s14, 0
      %p124 = por %p122, %p123
      %p125 = scmp.le.s32.totalorder 1, %s8
      %p126 = scmp.lt.s32.totalorder %s8, 13
      %p127 = pnand %p125, %p126
      %p128 = pneg %p127
      // Predicated region
      $region9: #{patcher_forward.3} parent=5 // pred_check
        _
      $region10: #{patcher_forward.3} parent=5 // pred_check_branch
        %130 = sbr.rel (%p127) target = $region12
      $region11: #{patcher_forward.3} parent=5 // pred_region
        %s131 = ssub.s32 %s8, 1
      $region12: #{patcher_forward.3} parent=5 // pred_fallthru
        _
      %p132 = scmp.lt.s32.totalorder %s8, 12
      // Predicated region
      $region13: #{patcher_forward.3} parent=5 // pred_check
        %p133 = pneg %p132
      $region14: #{patcher_forward.3} parent=5 // pred_check_branch
        %135 = sbr.rel (%p133) target = $region16
      $region15: #{patcher_forward.3} parent=5 // pred_region
        // Predicated region
        $region17: #{patcher_forward.3} parent=15 // pred_check
          %p136 = pneg %p51
        $region18: #{patcher_forward.3} parent=15 // pred_check_branch
          %138 = sbr.rel (%p136) target = $region20
        $region19: #{patcher_forward.3} parent=15 // pred_region
          %p139 = scmp.lt.s32.totalorder %s15, 1
          %s140 = scalar_select %p139, %s15, 1
          %p141 = scmp.lt.s32.totalorder %s16, 5
          %s142 = scalar_select %p141, %s16, 5
          %p143 = scmp.lt.s32.totalorder %s17, 0
          %s144 = scalar_select %p143, %s17, 0
          %s145 = smul.addr %s142, 2
          %s146 = sadd.s32 %s144, %s145
          %s147 = smul.addr %s140, 12
          %s148 = sadd.s32 %s146, %s147
          %s149 = smul.addr %s148, 8
          %s150 = scalar_lea.vmem %s0, %s149
        $region20: #{patcher_forward.3} parent=15 // pred_fallthru
          _
        // Predicated region
        $region21: #{patcher_forward.3} parent=15 // pred_check
          %p151 = pneg %p81
        $region22: #{patcher_forward.3} parent=15 // pred_check_branch
          %153 = sbr.rel (%p151) target = $region24
        $region23: #{patcher_forward.3} parent=15 // pred_region
          %p154 = scmp.lt.s32.totalorder %s15, 1
          %s155 = scalar_select %p154, %s15, 1
          %p156 = scmp.lt.s32.totalorder %s16, 5
          %s157 = scalar_select %p156, %s16, 5
          %p158 = scmp.lt.s32.totalorder %s17, 0
          %s159 = scalar_select %p158, %s17, 0
          %s160 = smul.addr %s157, 2
          %s161 = sadd.s32 %s159, %s160
          %s162 = smul.addr %s155, 12
          %s163 = sadd.s32 %s161, %s162
          %s164 = smul.addr %s163, 8
          %s165 = scalar_lea.vmem %s1, %s164
        $region24: #{patcher_forward.3} parent=15 // pred_fallthru
          _
      $region16: #{patcher_forward.3} parent=5 // pred_fallthru
        _
      %p166 = scmp.le.s32.totalorder 1, %s8
      %p167 = scmp.lt.s32.totalorder %s8, 13
      %p168 = pnand %p166, %p167
      %p169 = pneg %p168
      // Predicated region
      $region25: #{patcher_forward.3} parent=5 // pred_check
        _
      $region26: #{patcher_forward.3} parent=5 // pred_check_branch
        %171 = sbr.rel (%p168) target = $region28
      $region27: #{patcher_forward.3} parent=5 // pred_region
        %s172 = ssub.s32 %s8, 1
        %p173 = scmp.lt.s32.totalorder %s18, 1
        %s174 = scalar_select %p173, %s18, 1
        %p175 = scmp.lt.s32.totalorder %s19, 5
        %s176 = scalar_select %p175, %s19, 5
        %p177 = scmp.lt.s32.totalorder %s20, 0
        %s178 = scalar_select %p177, %s20, 0
        %s179 = smul.addr %s176, 2
        %s180 = sadd.s32 %s178, %s179
        %s181 = smul.addr %s174, 12
        %s182 = sadd.s32 %s180, %s181
        %s183 = smul.addr %s182, 8
        %s184 = scalar_lea.vmem %s0, %s183
        %p185 = pneg %p57
        %p186 = pneg %p54
        %p187 = scmp.lt.s32.totalorder %s18, 1
        %s188 = scalar_select %p187, %s18, 1
        %p189 = scmp.lt.s32.totalorder %s19, 5
        %s190 = scalar_select %p189, %s19, 5
        %p191 = scmp.lt.s32.totalorder %s20, 0
        %s192 = scalar_select %p191, %s20, 0
        %s193 = smul.addr %s190, 2
        %s194 = sadd.s32 %s192, %s193
        %s195 = smul.addr %s188, 12
        %s196 = sadd.s32 %s194, %s195
        %s197 = smul.addr %s196, 8
        %s198 = scalar_lea.vmem %s1, %s197
        %p199 = pneg %p87
        %p200 = pneg %p84
        %p201 = pneg %p117
        %p202 = pneg %p114
        %s203 = sand.u32 %s104, 1
        %s204 = sand.u32 %s104, 1
        %s205 = smul.addr %s204, 64
        %s206 = scalar_lea.vmem [#allocation2], %s205
        %p207 = scmp.lt.s32.totalorder %s18, 1
        %s208 = scalar_select %p207, %s18, 1
        %p209 = scmp.lt.s32.totalorder %s19, 5
        %s210 = scalar_select %p209, %s19, 5
        %p211 = scmp.lt.s32.totalorder %s20, 0
        %s212 = scalar_select %p211, %s20, 0
        %s213 = smul.addr %s210, 2
        %s214 = sadd.s32 %s212, %s213
        %s215 = smul.addr %s208, 12
        %s216 = sadd.s32 %s214, %s215
        %s217 = smul.addr %s216, 8
        %s218 = scalar_lea.vmem %s0, %s217
        %p219 = scmp.lt.s32.totalorder %s18, 1
        %s220 = scalar_select %p219, %s18, 1
        %p221 = scmp.lt.s32.totalorder %s19, 5
        %s222 = scalar_select %p221, %s19, 5
        %p223 = scmp.lt.s32.totalorder %s20, 0
        %s224 = scalar_select %p223, %s20, 0
        %s225 = smul.addr %s222, 2
        %s226 = sadd.s32 %s224, %s225
        %s227 = smul.addr %s220, 12
        %s228 = sadd.s32 %s226, %s227
        %s229 = smul.addr %s228, 8
        %s230 = scalar_lea.vmem %s1, %s229
        %v231 = vld [vmem:[%s218] sm:$0xff]
        %v232 = vld [vmem:[%s218 + $0x8] sm:$0xff]
        %v233 = vld [vmem:[%s230] sm:$0xff]
        %v234 = vld [vmem:[%s230 + $0x8] sm:$0xff]
        %v235 = vadd.f32 %v231, %v233
        %v236 = vsub.f32 %v231, %v233
        %v237 = vadd.f32 %v232, %v234
        %v238 = vsub.f32 %v232, %v234
        %240 = vrot.lane.b32.xlu0 %v235, 120
        %v241 = vpop.permute.xlu0 %240
        %v243 = vadd.f32 %v235, %v241
        %v244 = vsub.f32 %v235, %v241
        %246 = vrot.lane.b32.xlu0 %v236, 120
        %v247 = vpop.permute.xlu0 %246
        %v249 = vadd.f32 %v236, %v247
        %v250 = vsub.f32 %v236, %v247
        %252 = vrot.lane.b32.xlu0 %v237, 120
        %v253 = vpop.permute.xlu0 %252
        %v255 = vadd.f32 %v237, %v253
        %v256 = vsub.f32 %v237, %v253
        %258 = vrot.lane.b32.xlu0 %v238, 120
        %v259 = vpop.permute.xlu0 %258
        %v261 = vadd.f32 %v238, %v259
        %v262 = vsub.f32 %v238, %v259
        %v263 = vadd.f32 %v243, %v255
        %vm264 = vcmask 64512
        %265 = vst.msk [vmem:[%s206] sm:$0xff] %vm264, %v263
        %v266 = vadd.f32 %v249, %v261
        %s267 = scalar_lea.vmem %s206, 8 [#allocation2]
        %268 = vst.msk [vmem:[%s267] sm:$0xff] %vm264, %v266
        %v269 = vadd.f32 %v244, %v256
        %s270 = scalar_lea.vmem %s206, 16 [#allocation2]
        %271 = vst.msk [vmem:[%s270] sm:$0xff] %vm264, %v269
        %v272 = vadd.f32 %v250, %v262
        %s273 = scalar_lea.vmem %s206, 24 [#allocation2]
        %274 = vst.msk [vmem:[%s273] sm:$0xff] %vm264, %v272
        %v275 = vsub.f32 %v243, %v255
        %s276 = scalar_lea.vmem %s206, 32 [#allocation2]
        %277 = vst.msk [vmem:[%s276] sm:$0xff] %vm264, %v275
        %v278 = vsub.f32 %v249, %v261
        %s279 = scalar_lea.vmem %s206, 40 [#allocation2]
        %280 = vst.msk [vmem:[%s279] sm:$0xff] %vm264, %v278
        %v281 = vsub.f32 %v244, %v256
        %s282 = scalar_lea.vmem %s206, 48 [#allocation2]
        %283 = vst.msk [vmem:[%s282] sm:$0xff] %vm264, %v281
        %v284 = vsub.f32 %v250, %v262
        %s285 = scalar_lea.vmem %s206, 56 [#allocation2]
        %286 = vst.msk [vmem:[%s285] sm:$0xff] %vm264, %v284
        %s287 = sand.u32 %s104, 1
        %s288 = sand.u32 %s104, 1
        %s289 = smul.addr %s288, 64
        %s290 = scalar_lea.vmem [#allocation2], %s289
        // Predicated region
        $region29: #{patcher_forward.3} parent=27 // pred_check
          %p291 = pneg %p114
        $region30: #{patcher_forward.3} parent=27 // pred_check_branch
          %293 = sbr.rel (%p291) target = $region32
        $region31: #{patcher_forward.3} parent=27 // pred_region
          %s294 = sadd.s32 %s20, %s19
          %s295 = smul.addr %s18, 48
          %s296 = sadd.s32 %s294, %s295
          %s297 = smul.addr %s296, 8
          %s298 = scalar_lea.vmem %s2, %s297
          // Predicated region
          $region33: #{patcher_forward.3} parent=31 // pred_check
            _
          $region34: #{patcher_forward.3} parent=31 // pred_check_branch
            %300 = sbr.rel (0) target = $region36
          $region35: #{patcher_forward.3} parent=31 // pred_region
            // Predicated region
            $region37: #{patcher_forward.3} parent=35 // pred_check
              _
            $region38: #{patcher_forward.3} parent=35 // pred_check_branch
              %302 = sbr.rel (0) target = $region40
            $region39: #{patcher_forward.3} parent=35 // pred_region
              // Predicated region
              $region52: #{patcher_forward.3} parent=39 // pred_check
                _
              $region53: #{patcher_forward.3} parent=39 // pred_check_branch
                %331 = sbr.rel (0) target = $region55
              $region54: #{patcher_forward.3} parent=39 // pred_region
                loop: start=0, step=1, limit=1
                $region56: #{patcher_forward.3} parent=54 // loop_pre_header
                  _
                $region57: #{patcher_forward.3} parent=54 // loop_header
                  %s333 = sphi 0, %s337
                  %p334 = scmp.ge.s32.totalorder %s333, 1
                  %s338 = sphi %s290, %s290
                  %s339 = sphi %s298, %s298
                $region58: #{patcher_forward.3} parent=54 // loop_header_branch
                  %336 = sbr.rel (%p334) target = $region62
                $region59: #{patcher_forward.3} parent=54 // loop_body
                  %v340 = vld [vmem:[%s338] sm:$0xff]
                  %341 = vst [vmem:[%s339] sm:$0xff] %v340
                  %v342 = vld [vmem:[%s338 + $0x8] sm:$0xff]
                  %343 = vst [vmem:[%s339 + $0x30] sm:$0xff] %v342
                  %v344 = vld [vmem:[%s338 + $0x10] sm:$0xff]
                  %345 = vst [vmem:[%s339 + $0x60] sm:$0xff] %v344
                  %v346 = vld [vmem:[%s338 + $0x18] sm:$0xff]
                  %347 = vst [vmem:[%s339 + $0x90] sm:$0xff] %v346
                  %v348 = vld [vmem:[%s338 + $0x20] sm:$0xff]
                  %349 = vst [vmem:[%s339 + $0xc0] sm:$0xff] %v348
                  %v350 = vld [vmem:[%s338 + $0x28] sm:$0xff]
                  %351 = vst [vmem:[%s339 + $0xf0] sm:$0xff] %v350
                  %v352 = vld [vmem:[%s338 + $0x30] sm:$0xff]
                  %353 = vst [vmem:[%s339 + $0x120] sm:$0xff] %v352
                  %v354 = vld [vmem:[%s338 + $0x38] sm:$0xff]
                  %355 = vst [vmem:[%s339 + $0x150] sm:$0xff] %v354
                $region60: #{patcher_forward.3} parent=54 // loop_footer
                  %s337 = sadd.s32 1, %s333
                $region61: #{patcher_forward.3} parent=54 // loop_footer_branch
                  %332 = sbr.rel target = $region57
                $region62: #{patcher_forward.3} parent=54 // loop_exit
                  _
              $region55: #{patcher_forward.3} parent=39 // pred_fallthru
                _
              // Predicated region
              $region63: #{patcher_forward.3} parent=39 // pred_check
                _
              $region64: #{patcher_forward.3} parent=39 // pred_check_branch
                %357 = sbr.rel target = $region66
              $region65: #{patcher_forward.3} parent=39 // pred_region
                _
              $region66: #{patcher_forward.3} parent=39 // pred_fallthru
                _
            $region40: #{patcher_forward.3} parent=35 // pred_fallthru
              _
            // Predicated region
            $region41: #{patcher_forward.3} parent=35 // pred_check
              _
            $region42: #{patcher_forward.3} parent=35 // pred_check_branch
              %304 = sbr.rel target = $region44
            $region43: #{patcher_forward.3} parent=35 // pred_region
              loop: start=0, step=1, limit=1
              $region45: #{patcher_forward.3} parent=43 // loop_pre_header
                _
              $region46: #{patcher_forward.3} parent=43 // loop_header
                %s307 = sphi 0, %s311
                %p308 = scmp.ge.s32.totalorder %s307, 1
                %s312 = sphi %s290, %s290
                %s313 = sphi %s298, %s298
              $region47: #{patcher_forward.3} parent=43 // loop_header_branch
                %310 = sbr.rel (%p308) target = $region51
              $region48: #{patcher_forward.3} parent=43 // loop_body
                %v314 = vld [vmem:[%s312] sm:$0xff]
                %315 = vst [vmem:[%s313] sm:$0xff] %v314
                %v316 = vld [vmem:[%s312 + $0x8] sm:$0xff]
                %317 = vst [vmem:[%s313 + $0x30] sm:$0xff] %v316
                %v318 = vld [vmem:[%s312 + $0x10] sm:$0xff]
                %319 = vst [vmem:[%s313 + $0x60] sm:$0xff] %v318
                %v320 = vld [vmem:[%s312 + $0x18] sm:$0xff]
                %321 = vst [vmem:[%s313 + $0x90] sm:$0xff] %v320
                %v322 = vld [vmem:[%s312 + $0x20] sm:$0xff]
                %323 = vst [vmem:[%s313 + $0xc0] sm:$0xff] %v322
                %v324 = vld [vmem:[%s312 + $0x28] sm:$0xff]
                %325 = vst [vmem:[%s313 + $0xf0] sm:$0xff] %v324
                %v326 = vld [vmem:[%s312 + $0x30] sm:$0xff]
                %327 = vst [vmem:[%s313 + $0x120] sm:$0xff] %v326
                %v328 = vld [vmem:[%s312 + $0x38] sm:$0xff]
                %329 = vst [vmem:[%s313 + $0x150] sm:$0xff] %v328
              $region49: #{patcher_forward.3} parent=43 // loop_footer
                %s311 = sadd.s32 1, %s307
              $region50: #{patcher_forward.3} parent=43 // loop_footer_branch
                %306 = sbr.rel target = $region46
              $region51: #{patcher_forward.3} parent=43 // loop_exit
                _
            $region44: #{patcher_forward.3} parent=35 // pred_fallthru
              _
          $region36: #{patcher_forward.3} parent=31 // pred_fallthru
            _
          %358 = vnop
        $region32: #{patcher_forward.3} parent=27 // pred_fallthru
          _
      $region28: #{patcher_forward.3} parent=5 // pred_fallthru
        _
      %p359 = scmp.le.s32.totalorder 2, %s8
      // Predicated region
      $region67: #{patcher_forward.3} parent=5 // pred_check
        %p360 = pneg %p359
      $region68: #{patcher_forward.3} parent=5 // pred_check_branch
        %362 = sbr.rel (%p360) target = $region70
      $region69: #{patcher_forward.3} parent=5 // pred_region
        %s363 = ssub.s32 %s8, 2
        // Predicated region
        $region71: #{patcher_forward.3} parent=69 // pred_check
          %p364 = pneg %p120
        $region72: #{patcher_forward.3} parent=69 // pred_check_branch
          %366 = sbr.rel (%p364) target = $region74
        $region73: #{patcher_forward.3} parent=69 // pred_region
          %s367 = sand.u32 %s105, 1
          %s368 = sand.u32 %s105, 1
          %s369 = smul.addr %s368, 64
          %s370 = scalar_lea.vmem [#allocation2], %s369
        $region74: #{patcher_forward.3} parent=69 // pred_fallthru
          _
      $region70: #{patcher_forward.3} parent=5 // pred_fallthru
        _
    $region6: #{patcher_forward.3} parent=1 // loop_footer
      %s12 = sadd.s32 1, %s8
    $region7: #{patcher_forward.3} parent=1 // loop_footer_branch
      %7 = sbr.rel target = $region3
    $region8: #{patcher_forward.3} parent=1 // loop_exit
      _

// kernel: patcher_forward.2
$region0: #{patcher_forward.2}
  #allocation0 [shape = 'u32[]', space=smem, size = 0x4, offset = 0x4, fixed_abs, tag = 'smem constant byte address 0x4 - core index']
  #allocation1 [shape = 'u32[144,128]{1,0:T(1,128)}', space=vmem, size = 0x12000, scoped, tag = 'internal scratch']
  %s0 = inlined_call_operand.vmem [shape: f32[2,3,8,16], index: 0, kind: input, shape index: {}]
  %s1 = inlined_call_operand.vmem [shape: f32[2,3,8,16], index: 1, kind: input, shape index: {}]
  %s2 = inlined_call_operand.vmem [shape: f32[2,4,3,8,8], index: 2, kind: output, shape index: {}]
  %s3 = sld [smem:[#allocation0]]
  $region75: #{patcher_forward.2} parent=0
    _
  %s5 = ssub.s32 1, %s3
  %s6 = scalar_select 0, %s5, %s3
  $region1: #{patcher_forward.2} parent=0
    #allocation2 [shape = 'u8[32768]{0}', space=vmem, size = 0x8000, scoped, tag = 'output window, operand 0']
    loop: start=0, step=1, limit=8
    $region2: #{patcher_forward.2} parent=1 // loop_pre_header
      _
    $region3: #{patcher_forward.2} parent=1 // loop_header
      %s8 = sphi 0, %s12
      %p9 = scmp.ge.s32.totalorder %s8, 8
      %s15 = sphi 0, %s34
      %s16 = sphi 0, %s30
      %s17 = sphi 0, %s26
      %s18 = sphi 0, %s15
      %s19 = sphi 0, %s16
      %s20 = sphi 0, %s17
      %s21 = sphi 0, %s18
      %s22 = sphi 0, %s19
      %s23 = sphi 0, %s20
      %s41 = sphi 0, %s43
      %s44 = sphi 0, %s41
      %s45 = sphi 0, %s44
      %s61 = sphi 0, %s45
      %s71 = sphi 0, %s73
      %s74 = sphi 0, %s71
      %s75 = sphi 0, %s74
      %s91 = sphi 0, %s75
      %s101 = sphi 0, %s103
      %s104 = sphi 0, %s101
      %s105 = sphi 0, %s104
      %s121 = sphi 0, %s105
    $region4: #{patcher_forward.2} parent=1 // loop_header_branch
      %11 = sbr.rel (%p9) target = $region8
    $region5: #{patcher_forward.2} parent=1 // loop_body
      %s13 = ssub.s32 %s8, 1
      %s14 = ssub.s32 %s8, 2
      %s24 = sadd.s32 1, %s17
      %p25 = scmp.ge.s32.totalorder %s24, 1
      %s26 = scalar_select %p25, 0, %s24
      %s27 = sadd.s32 1, %s16
      %s28 = scalar_select %p25, %s27, %s16
      %p29 = scmp.ge.s32.totalorder %s28, 3
      %s30 = scalar_select %p29, 0, %s28
      %s31 = sadd.s32 1, %s15
      %s32 = scalar_select %p29, %s31, %s15
      %p33 = scmp.ge.s32.totalorder %s32, 2
      %s34 = scalar_select %p33, 0, %s32
      %s35 = ssub.s32 %s15, %s34
      %s36 = ssub.s32 %s16, %s30
      %s37 = sor.u32 %s35, %s36
      %s38 = ssub.s32 %s17, %s26
      %s39 = sor.u32 %s37, %s38
      %p40 = scmp.eq.s32.totalorder %s39, 0
      %s42 = sadd.s32 %s41, 1
      %s43 = scalar_select %p40, %s41, %s42
      %p46 = pneg %p40
      %p47 = scmp.eq.s32.totalorder %s8, 5
      %p48 = por %p46, %p47
      %p49 = scmp.ne.s32.totalorder %s41, %s44
      %p50 = scmp.eq.s32.totalorder %s8, 0
      %p51 = por %p49, %p50
      %p52 = scmp.ne.s32.totalorder %s41, %s44
      %p53 = scmp.eq.s32.totalorder %s13, 5
      %p54 = por %p52, %p53
      %p55 = scmp.ne.s32.totalorder %s44, %s45
      %p56 = scmp.eq.s32.totalorder %s13, 0
      %p57 = por %p55, %p56
      %p58 = scmp.ne.s32.totalorder %s44, %s45
      %p59 = scmp.eq.s32.totalorder %s14, 5
      %p60 = por %p58, %p59
      %p62 = scmp.ne.s32.totalorder %s45, %s61
      %p63 = scmp.eq.s32.totalorder %s14, 0
      %p64 = por %p62, %p63
      %s65 = ssub.s32 %s15, %s34
      %s66 = ssub.s32 %s16, %s30
      %s67 = sor.u32 %s65, %s66
      %s68 = ssub.s32 %s17, %s26
      %s69 = sor.u32 %s67, %s68
      %p70 = scmp.eq.s32.totalorder %s69, 0
      %s72 = sadd.s32 %s71, 1
      %s73 = scalar_select %p70, %s71, %s72
      %p76 = pneg %p70
      %p77 = scmp.eq.s32.totalorder %s8, 5
      %p78 = por %p76, %p77
      %p79 = scmp.ne.s32.totalorder %s71, %s74
      %p80 = scmp.eq.s32.totalorder %s8, 0
      %p81 = por %p79, %p80
      %p82 = scmp.ne.s32.totalorder %s71, %s74
      %p83 = scmp.eq.s32.totalorder %s13, 5
      %p84 = por %p82, %p83
      %p85 = scmp.ne.s32.totalorder %s74, %s75
      %p86 = scmp.eq.s32.totalorder %s13, 0
      %p87 = por %p85, %p86
      %p88 = scmp.ne.s32.totalorder %s74, %s75
      %p89 = scmp.eq.s32.totalorder %s14, 5
      %p90 = por %p88, %p89
      %p92 = scmp.ne.s32.totalorder %s75, %s91
      %p93 = scmp.eq.s32.totalorder %s14, 0
      %p94 = por %p92, %p93
      %s95 = ssub.s32 %s15, %s34
      %s96 = ssub.s32 %s16, %s30
      %s97 = sor.u32 %s95, %s96
      %s98 = ssub.s32 %s17, %s26
      %s99 = sor.u32 %s97, %s98
      %p100 = scmp.eq.s32.totalorder %s99, 0
      %s102 = sadd.s32 %s101, 1
      %s103 = scalar_select %p100, %s101, %s102
      %p106 = pneg %p100
      %p107 = scmp.eq.s32.totalorder %s8, 5
      %p108 = por %p106, %p107
      %p109 = scmp.ne.s32.totalorder %s101, %s104
      %p110 = scmp.eq.s32.totalorder %s8, 0
      %p111 = por %p109, %p110
      %p112 = scmp.ne.s32.totalorder %s101, %s104
      %p113 = scmp.eq.s32.totalorder %s13, 5
      %p114 = por %p112, %p113
      %p115 = scmp.ne.s32.totalorder %s104, %s105
      %p116 = scmp.eq.s32.totalorder %s13, 0
      %p117 = por %p115, %p116
      %p118 = scmp.ne.s32.totalorder %s104, %s105
      %p119 = scmp.eq.s32.totalorder %s14, 5
      %p120 = por %p118, %p119
      %p122 = scmp.ne.s32.totalorder %s105, %s121
      %p123 = scmp.eq.s32.totalorder %s14, 0
      %p124 = por %p122, %p123
      %p125 = scmp.le.s32.totalorder 1, %s8
      %p126 = scmp.lt.s32.totalorder %s8, 7
      %p127 = pnand %p125, %p126
      %p128 = pneg %p127
      // Predicated region
      $region9: #{patcher_forward.2} parent=5 // pred_check
        _
      $region10: #{patcher_forward.2} parent=5 // pred_check_branch
        %130 = sbr.rel (%p127) target = $region12
      $region11: #{patcher_forward.2} parent=5 // pred_region
        %s131 = ssub.s32 %s8, 1
      $region12: #{patcher_forward.2} parent=5 // pred_fallthru
        _
      %p132 = scmp.lt.s32.totalorder %s8, 6
      // Predicated region
      $region13: #{patcher_forward.2} parent=5 // pred_check
        %p133 = pneg %p132
      $region14: #{patcher_forward.2} parent=5 // pred_check_branch
        %135 = sbr.rel (%p133) target = $region16
      $region15: #{patcher_forward.2} parent=5 // pred_region
        // Predicated region
        $region17: #{patcher_forward.2} parent=15 // pred_check
          %p136 = pneg %p51
        $region18: #{patcher_forward.2} parent=15 // pred_check_branch
          %138 = sbr.rel (%p136) target = $region20
        $region19: #{patcher_forward.2} parent=15 // pred_region
          %p139 = scmp.lt.s32.totalorder %s15, 1
          %s140 = scalar_select %p139, %s15, 1
          %p141 = scmp.lt.s32.totalorder %s16, 2
          %s142 = scalar_select %p141, %s16, 2
          %p143 = scmp.lt.s32.totalorder %s17, 0
          %s144 = scalar_select %p143, %s17, 0
          %s145 = sadd.s32 %s144, %s142
          %s146 = smul.addr %s140, 3
          %s147 = sadd.s32 %s145, %s146
          %s148 = smul.addr %s147, 8
          %s149 = scalar_lea.vmem %s0, %s148
        $region20: #{patcher_forward.2} parent=15 // pred_fallthru
          _
        // Predicated region
        $region21: #{patcher_forward.2} parent=15 // pred_check
          %p150 = pneg %p81
        $region22: #{patcher_forward.2} parent=15 // pred_check_branch
          %152 = sbr.rel (%p150) target = $region24
        $region23: #{patcher_forward.2} parent=15 // pred_region
          %p153 = scmp.lt.s32.totalorder %s15, 1
          %s154 = scalar_select %p153, %s15, 1
          %p155 = scmp.lt.s32.totalorder %s16, 2
          %s156 = scalar_select %p155, %s16, 2
          %p157 = scmp.lt.s32.totalorder %s17, 0
          %s158 = scalar_select %p157, %s17, 0
          %s159 = sadd.s32 %s158, %s156
          %s160 = smul.addr %s154, 3
          %s161 = sadd.s32 %s159, %s160
          %s162 = smul.addr %s161, 8
          %s163 = scalar_lea.vmem %s1, %s162
        $region24: #{patcher_forward.2} parent=15 // pred_fallthru
          _
      $region16: #{patcher_forward.2} parent=5 // pred_fallthru
        _
      %p164 = scmp.le.s32.totalorder 1, %s8
      %p165 = scmp.lt.s32.totalorder %s8, 7
      %p166 = pnand %p164, %p165
      %p167 = pneg %p166
      // Predicated region
      $region25: #{patcher_forward.2} parent=5 // pred_check
        _
      $region26: #{patcher_forward.2} parent=5 // pred_check_branch
        %169 = sbr.rel (%p166) target = $region28
      $region27: #{patcher_forward.2} parent=5 // pred_region
        %s170 = ssub.s32 %s8, 1
        %p171 = scmp.lt.s32.totalorder %s18, 1
        %s172 = scalar_select %p171, %s18, 1
        %p173 = scmp.lt.s32.totalorder %s19, 2
        %s174 = scalar_select %p173, %s19, 2
        %p175 = scmp.lt.s32.totalorder %s20, 0
        %s176 = scalar_select %p175, %s20, 0
        %s177 = sadd.s32 %s176, %s174
        %s178 = smul.addr %s172, 3
        %s179 = sadd.s32 %s177, %s178
        %s180 = smul.addr %s179, 8
        %s181 = scalar_lea.vmem %s0, %s180
        %p182 = pneg %p57
        %p183 = pneg %p54
        %p184 = scmp.lt.s32.totalorder %s18, 1
        %s185 = scalar_select %p184, %s18, 1
        %p186 = scmp.lt.s32.totalorder %s19, 2
        %s187 = scalar_select %p186, %s19, 2
        %p188 = scmp.lt.s32.totalorder %s20, 0
        %s189 = scalar_select %p188, %s20, 0
        %s190 = sadd.s32 %s189, %s187
        %s191 = smul.addr %s185, 3
        %s192 = sadd.s32 %s190, %s191
        %s193 = smul.addr %s192, 8
        %s194 = scalar_lea.vmem %s1, %s193
        %p195 = pneg %p87
        %p196 = pneg %p84
        %p197 = pneg %p117
        %p198 = pneg %p114
        %s199 = sand.u32 %s104, 1
        %s200 = sand.u32 %s104, 1
        %s201 = smul.addr %s200, 32
        %s202 = scalar_lea.vmem [#allocation2], %s201
        %p203 = scmp.lt.s32.totalorder %s18, 1
        %s204 = scalar_select %p203, %s18, 1
        %p205 = scmp.lt.s32.totalorder %s19, 2
        %s206 = scalar_select %p205, %s19, 2
        %p207 = scmp.lt.s32.totalorder %s20, 0
        %s208 = scalar_select %p207, %s20, 0
        %s209 = sadd.s32 %s208, %s206
        %s210 = smul.addr %s204, 3
        %s211 = sadd.s32 %s209, %s210
        %s212 = smul.addr %s211, 8
        %s213 = scalar_lea.vmem %s0, %s212
        %p214 = scmp.lt.s32.totalorder %s18, 1
        %s215 = scalar_select %p214, %s18, 1
        %p216 = scmp.lt.s32.totalorder %s19, 2
        %s217 = scalar_select %p216, %s19, 2
        %p218 = scmp.lt.s32.totalorder %s20, 0
        %s219 = scalar_select %p218, %s20, 0
        %s220 = sadd.s32 %s219, %s217
        %s221 = smul.addr %s215, 3
        %s222 = sadd.s32 %s220, %s221
        %s223 = smul.addr %s222, 8
        %s224 = scalar_lea.vmem %s1, %s223
        %v225 = vld [vmem:[%s213] sm:$0xff]
        %v226 = vld [vmem:[%s224] sm:$0xff]
        %v227 = vadd.f32 %v225, %v226
        %v228 = vsub.f32 %v225, %v226
        %230 = vrot.lane.b32.xlu0 %v227, 120
        %v231 = vpop.permute.xlu0 %230
        %v233 = vadd.f32 %v227, %v231
        %vm234 = vcmask 64512
        %235 = vst.msk [vmem:[%s202] sm:$0xff] %vm234, %v233
        %v236 = vsub.f32 %v227, %v231
        %s237 = scalar_lea.vmem %s202, 8 [#allocation2]
        %238 = vst.msk [vmem:[%s237] sm:$0xff] %vm234, %v236
        %240 = vrot.lane.b32.xlu0 %v228, 120
        %v241 = vpop.permute.xlu0 %240
        %v243 = vadd.f32 %v228, %v241
        %s244 = scalar_lea.vmem %s202, 16 [#allocation2]
        %245 = vst.msk [vmem:[%s244] sm:$0xff] %vm234, %v243
        %v246 = vsub.f32 %v228, %v241
        %s247 = scalar_lea.vmem %s202, 24 [#allocation2]
        %248 = vst.msk [vmem:[%s247] sm:$0xff] %vm234, %v246
        %s249 = sand.u32 %s104, 1
        %s250 = sand.u32 %s104, 1
        %s251 = smul.addr %s250, 32
        %s252 = scalar_lea.vmem [#allocation2], %s251
        // Predicated region
        $region29: #{patcher_forward.2} parent=27 // pred_check
          %p253 = pneg %p114
        $region30: #{patcher_forward.2} parent=27 // pred_check_branch
          %255 = sbr.rel (%p253) target = $region32
        $region31: #{patcher_forward.2} parent=27 // pred_region
          %s256 = sadd.s32 %s20, %s19
          %s257 = smul.addr %s18, 12
          %s258 = sadd.s32 %s256, %s257
          %s259 = smul.addr %s258, 8
          %s260 = scalar_lea.vmem %s2, %s259
          // Predicated region
          $region33: #{patcher_forward.2} parent=31 // pred_check
            _
          $region34: #{patcher_forward.2} parent=31 // pred_check_branch
            %262 = sbr.rel (0) target = $region36
          $region35: #{patcher_forward.2} parent=31 // pred_region
            // Predicated region
            $region37: #{patcher_forward.2} parent=35 // pred_check
              _
            $region38: #{patcher_forward.2} parent=35 // pred_check_branch
              %264 = sbr.rel (0) target = $region40
            $region39: #{patcher_forward.2} parent=35 // pred_region
              // Predicated region
              $region52: #{patcher_forward.2} parent=39 // pred_check
                _
              $region53: #{patcher_forward.2} parent=39 // pred_check_branch
                %285 = sbr.rel (0) target = $region55
              $region54: #{patcher_forward.2} parent=39 // pred_region
                loop: start=0, step=1, limit=1
                $region56: #{patcher_forward.2} parent=54 // loop_pre_header
                  _
                $region57: #{patcher_forward.2} parent=54 // loop_header
                  %s287 = sphi 0, %s291
                  %p288 = scmp.ge.s32.totalorder %s287, 1
                  %s292 = sphi %s252, %s252
                  %s293 = sphi %s260, %s260
                $region58: #{patcher_forward.2} parent=54 // loop_header_branch
                  %290 = sbr.rel (%p288) target = $region62
                $region59: #{patcher_forward.2} parent=54 // loop_body
                  %v294 = vld [vmem:[%s292] sm:$0xff]
                  %295 = vst [vmem:[%s293] sm:$0xff] %v294
                  %v296 = vld [vmem:[%s292 + $0x8] sm:$0xff]
                  %297 = vst [vmem:[%s293 + $0x18] sm:$0xff] %v296
                  %v298 = vld [vmem:[%s292 + $0x10] sm:$0xff]
                  %299 = vst [vmem:[%s293 + $0x30] sm:$0xff] %v298
                  %v300 = vld [vmem:[%s292 + $0x18] sm:$0xff]
                  %301 = vst [vmem:[%s293 + $0x48] sm:$0xff] %v300
                $region60: #{patcher_forward.2} parent=54 // loop_footer
                  %s291 = sadd.s32 1, %s287
                $region61: #{patcher_forward.2} parent=54 // loop_footer_branch
                  %286 = sbr.rel target = $region57
                $region62: #{patcher_forward.2} parent=54 // loop_exit
                  _
              $region55: #{patcher_forward.2} parent=39 // pred_fallthru
                _
              // Predicated region
              $region63: #{patcher_forward.2} parent=39 // pred_check
                _
              $region64: #{patcher_forward.2} parent=39 // pred_check_branch
                %303 = sbr.rel target = $region66
              $region65: #{patcher_forward.2} parent=39 // pred_region
                _
              $region66: #{patcher_forward.2} parent=39 // pred_fallthru
                _
            $region40: #{patcher_forward.2} parent=35 // pred_fallthru
              _
            // Predicated region
            $region41: #{patcher_forward.2} parent=35 // pred_check
              _
            $region42: #{patcher_forward.2} parent=35 // pred_check_branch
              %266 = sbr.rel target = $region44
            $region43: #{patcher_forward.2} parent=35 // pred_region
              loop: start=0, step=1, limit=1
              $region45: #{patcher_forward.2} parent=43 // loop_pre_header
                _
              $region46: #{patcher_forward.2} parent=43 // loop_header
                %s269 = sphi 0, %s273
                %p270 = scmp.ge.s32.totalorder %s269, 1
                %s274 = sphi %s252, %s252
                %s275 = sphi %s260, %s260
              $region47: #{patcher_forward.2} parent=43 // loop_header_branch
                %272 = sbr.rel (%p270) target = $region51
              $region48: #{patcher_forward.2} parent=43 // loop_body
                %v276 = vld [vmem:[%s274] sm:$0xff]
                %277 = vst [vmem:[%s275] sm:$0xff] %v276
                %v278 = vld [vmem:[%s274 + $0x8] sm:$0xff]
                %279 = vst [vmem:[%s275 + $0x18] sm:$0xff] %v278
                %v280 = vld [vmem:[%s274 + $0x10] sm:$0xff]
                %281 = vst [vmem:[%s275 + $0x30] sm:$0xff] %v280
                %v282 = vld [vmem:[%s274 + $0x18] sm:$0xff]
                %283 = vst [vmem:[%s275 + $0x48] sm:$0xff] %v282
              $region49: #{patcher_forward.2} parent=43 // loop_footer
                %s273 = sadd.s32 1, %s269
              $region50: #{patcher_forward.2} parent=43 // loop_footer_branch
                %268 = sbr.rel target = $region46
              $region51: #{patcher_forward.2} parent=43 // loop_exit
                _
            $region44: #{patcher_forward.2} parent=35 // pred_fallthru
              _
          $region36: #{patcher_forward.2} parent=31 // pred_fallthru
            _
          %304 = vnop
        $region32: #{patcher_forward.2} parent=27 // pred_fallthru
          _
      $region28: #{patcher_forward.2} parent=5 // pred_fallthru
        _
      %p305 = scmp.le.s32.totalorder 2, %s8
      // Predicated region
      $region67: #{patcher_forward.2} parent=5 // pred_check
        %p306 = pneg %p305
      $region68: #{patcher_forward.2} parent=5 // pred_check_branch
        %308 = sbr.rel (%p306) target = $region70
      $region69: #{patcher_forward.2} parent=5 // pred_region
        %s309 = ssub.s32 %s8, 2
        // Predicated region
        $region71: #{patcher_forward.2} parent=69 // pred_check
          %p310 = pneg %p120
        $region72: #{patcher_forward.2} parent=69 // pred_check_branch
          %312 = sbr.rel (%p310) target = $region74
        $region73: #{patcher_forward.2} parent=69 // pred_region
          %s313 = sand.u32 %s105, 1
          %s314 = sand.u32 %s105, 1
          %s315 = smul.addr %s314, 32
          %s316 = scalar_lea.vmem [#allocation2], %s315
        $region74: #{patcher_forward.2} parent=69 // pred_fallthru
          _
      $region70: #{patcher_forward.2} parent=5 // pred_fallthru
        _
    $region6: #{patcher_forward.2} parent=1 // loop_footer
      %s12 = sadd.s32 1, %s8
    $region7: #{patcher_forward.2} parent=1 // loop_footer_branch
      %7 = sbr.rel target = $region3
    $region8: #{patcher_forward.2} parent=1 // loop_exit
      _

</llo_original>
